<compile_context>
chip_gen: v7x
topology: tpu7x:2x2x1
jax: 0.10.0
libtpu: 0.0.40
codegen_flags: <defaults>
</compile_context>

<pallas_src>
import numpy as np
import jax
import jax.numpy as jnp
from jax.experimental import pallas as pl
from jax.experimental.pallas import tpu as pltpu

PAD = 128        # lane-padded length (batch B <= PAD)
NEG_PAD = -1e30  # pad value for risk rows: behaves as -inf without producing NaNs


def coxph_kernel(packed_ref, out_ref):
    # packed_ref: (2, PAD) f32 in VMEM, already sorted by descending time.
    #   row 0 = risk   (pads = NEG_PAD)
    #   row 1 = event  (pads = 0)
    # out_ref: (1, 1) f32 scalar in SMEM.
    risk = packed_ref[0:1, :]                      # (1, PAD)
    event = packed_ref[1:2, :]                     # (1, PAD)

    # Per-position-stable inclusive logcumsumexp along the lane axis:
    # Hillis–Steele scan with the associative combine
    #   (m1, s1) ⊕ (m2, s2) = (max, s1*exp(m1-max) + s2*exp(m2-max)).
    # 7 steps of pltpu.roll (XLU) + a handful of VPU/EUP ops, all on one native
    # (8, 128) vreg tile (rows are identical copies).  Identity element for the
    # masked wrap-around lanes is (NEG_PAD, 0).
    lane = jax.lax.broadcasted_iota(jnp.int32, (8, PAD), 1)
    m = jnp.broadcast_to(risk, (8, PAD))
    s = jnp.ones((8, PAD), jnp.float32)
    shift = 1
    for _ in range(7):                              # log2(PAD) steps
        valid = lane >= shift
        m_sh = jnp.where(valid, pltpu.roll(m, shift=shift, axis=1), NEG_PAD)
        s_sh = jnp.where(valid, pltpu.roll(s, shift=shift, axis=1), 0.0)
        m_new = jnp.maximum(m, m_sh)
        s = s * jnp.exp(m - m_new) + s_sh * jnp.exp(m_sh - m_new)
        m = m_new
        shift *= 2
    log_den = (m + jnp.log(s))[0:1, :]              # (1, PAD) = logcumsumexp(risk)

    # Final reduction in row form.  where() guards censored padded lanes
    # (log_den may be junk there) from inf*0 -> nan.
    num = jnp.sum(jnp.where(event > 0, risk - log_den, 0.0) * event)
    den = jnp.sum(event) + jnp.float32(1e-8)
    out_ref[0, 0] = -num / den


@jax.jit
def coxph_loss(risk, time, event):
    """Cox partial-likelihood loss. risk/time/event: shape [B] (B <= 128)."""
    B = risk.shape[0]
    assert B <= PAD, "batch larger than PAD not supported in this kernel"

    risk_f = risk.astype(jnp.float32)
    time_f = time.astype(jnp.float32)
    event_f = event.astype(jnp.float32)

    # Single fused multi-operand sort: key = -time (ascending) == time descending,
    # stable ties.  Matches torch.sort(descending=True) + gather semantics.
    # TODO(synk): the sort itself has no clean Pallas TPU equivalent; it stays as
    # one XLA op of glue.  All loss math runs in the kernel.
    _, risk_s, event_s = jax.lax.sort(
        (-time_f, risk_f, event_f), num_keys=1, is_stable=True)

    pad = PAD - B
    risk_p = jnp.pad(risk_s, (0, pad), constant_values=NEG_PAD)
    event_p = jnp.pad(event_s, (0, pad))
    packed = jnp.stack([risk_p, event_p], axis=0)   # (2, PAD): one (8,128) tile

    out = pl.pallas_call(
        coxph_kernel,
        out_shape=jax.ShapeDtypeStruct((1, 1), jnp.float32),
        in_specs=[pl.BlockSpec(memory_space=pltpu.VMEM)],
        out_specs=pl.BlockSpec(memory_space=pltpu.SMEM),
        # No grid: a few vregs of work; kernel is launch-overhead bound.
    )(packed)
    return out[0, 0]


def _reference_loss(risk, time, event):
    # numpy reference mirroring the PyTorch forward (stable streaming logcumsumexp)
    order = np.argsort(-np.asarray(time, dtype=np.float32), kind="stable")
    r = np.asarray(risk, dtype=np.float32)[order]
    e = np.asarray(event, dtype=np.float32)[order]
    log_den = np.zeros_like(r)
    m, s = -np.inf, 0.0
    for i, x in enumerate(r):
        m_new = max(m, x)
        s = s * np.exp(m - m_new) + np.exp(x - m_new)
        m = m_new
        log_den[i] = m + np.log(s)
    return -np.sum((r - log_den) * e) / (e.sum() + 1e-8)


if __name__ == "__main__":
    key = jax.random.PRNGKey(0)
    k1, k2, k3 = jax.random.split(key, 3)
    B = 8
    risk = jax.random.normal(k1, (B,), dtype=jnp.float32)
    time = jax.random.uniform(k2, (B,), dtype=jnp.float32, minval=0.1, maxval=10.0)
    event = (jax.random.uniform(k3, (B,)) > 0.4).astype(jnp.float32)

    loss = coxph_loss(risk, time, event)
    jax.block_until_ready(loss)

    ref = _reference_loss(np.array(risk), np.array(time), np.array(event))
    assert np.allclose(float(loss), float(ref), rtol=1e-5, atol=1e-5), (float(loss), float(ref))
    print("KERNEL_OK")
</pallas_src>

<mosaic_0001>
module attributes {stable_mosaic.version = 11 : i64} {
  func.func @coxph_kernel(%arg0: memref<2x128xf32, #tpu.memory_space<vmem>>, %arg1: memref<1x1xf32, #tpu.memory_space<smem>>) attributes {dimension_semantics = [], scalar_prefetch = 0 : i64, scratch_operands = 0 : i64, tpu.core_type = #tpu.core_type<tc>} {
    %c0 = arith.constant 0 : index
    %c0_0 = arith.constant 0 : index
    %0 = vector.load %arg0[%c0, %c0_0] : memref<2x128xf32, #tpu.memory_space<vmem>>, vector<1x128xf32>
    %c1 = arith.constant 1 : index
    %c0_1 = arith.constant 0 : index
    %1 = vector.load %arg0[%c1, %c0_1] : memref<2x128xf32, #tpu.memory_space<vmem>>, vector<1x128xf32>
    %2 = tpu.iota {dimensions = array<i32: 1>} : vector<8x128xi32>
    %3 = vector.shape_cast %0 : vector<1x128xf32> to vector<1x128xf32>
    %4 = vector.broadcast %3 : vector<1x128xf32> to vector<8x128xf32>
    %cst = arith.constant 1.000000e+00 : f32
    %5 = vector.broadcast %cst : f32 to vector<8x128xf32>
    %c1_i32 = arith.constant 1 : i32
    %6 = vector.broadcast %c1_i32 : i32 to vector<8x128xi32>
    %7 = arith.cmpi sge, %2, %6 : vector<8x128xi32>
    %c1_i32_2 = arith.constant 1 : i32
    %8 = tpu.dynamic_rotate %4 by %c1_i32_2 dim 1 : vector<8x128xf32>, i32 -> vector<8x128xf32>
    %cst_3 = arith.constant -1.000000e+30 : f32
    %9 = vector.broadcast %cst_3 : f32 to vector<8x128xf32>
    %10 = arith.select %7, %8, %9 : vector<8x128xi1>, vector<8x128xf32>
    %c1_i32_4 = arith.constant 1 : i32
    %11 = tpu.dynamic_rotate %5 by %c1_i32_4 dim 1 : vector<8x128xf32>, i32 -> vector<8x128xf32>
    %cst_5 = arith.constant 0.000000e+00 : f32
    %12 = vector.broadcast %cst_5 : f32 to vector<8x128xf32>
    %13 = arith.select %7, %11, %12 : vector<8x128xi1>, vector<8x128xf32>
    %14 = arith.maximumf %4, %10 : vector<8x128xf32>
    %15 = arith.subf %4, %14 : vector<8x128xf32>
    %16 = math.exp %15 : vector<8x128xf32>
    %17 = arith.mulf %5, %16 : vector<8x128xf32>
    %18 = arith.subf %10, %14 : vector<8x128xf32>
    %19 = math.exp %18 : vector<8x128xf32>
    %20 = arith.mulf %13, %19 : vector<8x128xf32>
    %21 = arith.addf %17, %20 : vector<8x128xf32>
    %c2_i32 = arith.constant 2 : i32
    %22 = vector.broadcast %c2_i32 : i32 to vector<8x128xi32>
    %23 = arith.cmpi sge, %2, %22 : vector<8x128xi32>
    %c2_i32_6 = arith.constant 2 : i32
    %24 = tpu.dynamic_rotate %14 by %c2_i32_6 dim 1 : vector<8x128xf32>, i32 -> vector<8x128xf32>
    %cst_7 = arith.constant -1.000000e+30 : f32
    %25 = vector.broadcast %cst_7 : f32 to vector<8x128xf32>
    %26 = arith.select %23, %24, %25 : vector<8x128xi1>, vector<8x128xf32>
    %c2_i32_8 = arith.constant 2 : i32
    %27 = tpu.dynamic_rotate %21 by %c2_i32_8 dim 1 : vector<8x128xf32>, i32 -> vector<8x128xf32>
    %cst_9 = arith.constant 0.000000e+00 : f32
    %28 = vector.broadcast %cst_9 : f32 to vector<8x128xf32>
    %29 = arith.select %23, %27, %28 : vector<8x128xi1>, vector<8x128xf32>
    %30 = arith.maximumf %14, %26 : vector<8x128xf32>
    %31 = arith.subf %14, %30 : vector<8x128xf32>
    %32 = math.exp %31 : vector<8x128xf32>
    %33 = arith.mulf %21, %32 : vector<8x128xf32>
    %34 = arith.subf %26, %30 : vector<8x128xf32>
    %35 = math.exp %34 : vector<8x128xf32>
    %36 = arith.mulf %29, %35 : vector<8x128xf32>
    %37 = arith.addf %33, %36 : vector<8x128xf32>
    %c4_i32 = arith.constant 4 : i32
    %38 = vector.broadcast %c4_i32 : i32 to vector<8x128xi32>
    %39 = arith.cmpi sge, %2, %38 : vector<8x128xi32>
    %c4_i32_10 = arith.constant 4 : i32
    %40 = tpu.dynamic_rotate %30 by %c4_i32_10 dim 1 : vector<8x128xf32>, i32 -> vector<8x128xf32>
    %cst_11 = arith.constant -1.000000e+30 : f32
    %41 = vector.broadcast %cst_11 : f32 to vector<8x128xf32>
    %42 = arith.select %39, %40, %41 : vector<8x128xi1>, vector<8x128xf32>
    %c4_i32_12 = arith.constant 4 : i32
    %43 = tpu.dynamic_rotate %37 by %c4_i32_12 dim 1 : vector<8x128xf32>, i32 -> vector<8x128xf32>
    %cst_13 = arith.constant 0.000000e+00 : f32
    %44 = vector.broadcast %cst_13 : f32 to vector<8x128xf32>
    %45 = arith.select %39, %43, %44 : vector<8x128xi1>, vector<8x128xf32>
    %46 = arith.maximumf %30, %42 : vector<8x128xf32>
    %47 = arith.subf %30, %46 : vector<8x128xf32>
    %48 = math.exp %47 : vector<8x128xf32>
    %49 = arith.mulf %37, %48 : vector<8x128xf32>
    %50 = arith.subf %42, %46 : vector<8x128xf32>
    %51 = math.exp %50 : vector<8x128xf32>
    %52 = arith.mulf %45, %51 : vector<8x128xf32>
    %53 = arith.addf %49, %52 : vector<8x128xf32>
    %c8_i32 = arith.constant 8 : i32
    %54 = vector.broadcast %c8_i32 : i32 to vector<8x128xi32>
    %55 = arith.cmpi sge, %2, %54 : vector<8x128xi32>
    %c8_i32_14 = arith.constant 8 : i32
    %56 = tpu.dynamic_rotate %46 by %c8_i32_14 dim 1 : vector<8x128xf32>, i32 -> vector<8x128xf32>
    %cst_15 = arith.constant -1.000000e+30 : f32
    %57 = vector.broadcast %cst_15 : f32 to vector<8x128xf32>
    %58 = arith.select %55, %56, %57 : vector<8x128xi1>, vector<8x128xf32>
    %c8_i32_16 = arith.constant 8 : i32
    %59 = tpu.dynamic_rotate %53 by %c8_i32_16 dim 1 : vector<8x128xf32>, i32 -> vector<8x128xf32>
    %cst_17 = arith.constant 0.000000e+00 : f32
    %60 = vector.broadcast %cst_17 : f32 to vector<8x128xf32>
    %61 = arith.select %55, %59, %60 : vector<8x128xi1>, vector<8x128xf32>
    %62 = arith.maximumf %46, %58 : vector<8x128xf32>
    %63 = arith.subf %46, %62 : vector<8x128xf32>
    %64 = math.exp %63 : vector<8x128xf32>
    %65 = arith.mulf %53, %64 : vector<8x128xf32>
    %66 = arith.subf %58, %62 : vector<8x128xf32>
    %67 = math.exp %66 : vector<8x128xf32>
    %68 = arith.mulf %61, %67 : vector<8x128xf32>
    %69 = arith.addf %65, %68 : vector<8x128xf32>
    %c16_i32 = arith.constant 16 : i32
    %70 = vector.broadcast %c16_i32 : i32 to vector<8x128xi32>
    %71 = arith.cmpi sge, %2, %70 : vector<8x128xi32>
    %c16_i32_18 = arith.constant 16 : i32
    %72 = tpu.dynamic_rotate %62 by %c16_i32_18 dim 1 : vector<8x128xf32>, i32 -> vector<8x128xf32>
    %cst_19 = arith.constant -1.000000e+30 : f32
    %73 = vector.broadcast %cst_19 : f32 to vector<8x128xf32>
    %74 = arith.select %71, %72, %73 : vector<8x128xi1>, vector<8x128xf32>
    %c16_i32_20 = arith.constant 16 : i32
    %75 = tpu.dynamic_rotate %69 by %c16_i32_20 dim 1 : vector<8x128xf32>, i32 -> vector<8x128xf32>
    %cst_21 = arith.constant 0.000000e+00 : f32
    %76 = vector.broadcast %cst_21 : f32 to vector<8x128xf32>
    %77 = arith.select %71, %75, %76 : vector<8x128xi1>, vector<8x128xf32>
    %78 = arith.maximumf %62, %74 : vector<8x128xf32>
    %79 = arith.subf %62, %78 : vector<8x128xf32>
    %80 = math.exp %79 : vector<8x128xf32>
    %81 = arith.mulf %69, %80 : vector<8x128xf32>
    %82 = arith.subf %74, %78 : vector<8x128xf32>
    %83 = math.exp %82 : vector<8x128xf32>
    %84 = arith.mulf %77, %83 : vector<8x128xf32>
    %85 = arith.addf %81, %84 : vector<8x128xf32>
    %c32_i32 = arith.constant 32 : i32
    %86 = vector.broadcast %c32_i32 : i32 to vector<8x128xi32>
    %87 = arith.cmpi sge, %2, %86 : vector<8x128xi32>
    %c32_i32_22 = arith.constant 32 : i32
    %88 = tpu.dynamic_rotate %78 by %c32_i32_22 dim 1 : vector<8x128xf32>, i32 -> vector<8x128xf32>
    %cst_23 = arith.constant -1.000000e+30 : f32
    %89 = vector.broadcast %cst_23 : f32 to vector<8x128xf32>
    %90 = arith.select %87, %88, %89 : vector<8x128xi1>, vector<8x128xf32>
    %c32_i32_24 = arith.constant 32 : i32
    %91 = tpu.dynamic_rotate %85 by %c32_i32_24 dim 1 : vector<8x128xf32>, i32 -> vector<8x128xf32>
    %cst_25 = arith.constant 0.000000e+00 : f32
    %92 = vector.broadcast %cst_25 : f32 to vector<8x128xf32>
    %93 = arith.select %87, %91, %92 : vector<8x128xi1>, vector<8x128xf32>
    %94 = arith.maximumf %78, %90 : vector<8x128xf32>
    %95 = arith.subf %78, %94 : vector<8x128xf32>
    %96 = math.exp %95 : vector<8x128xf32>
    %97 = arith.mulf %85, %96 : vector<8x128xf32>
    %98 = arith.subf %90, %94 : vector<8x128xf32>
    %99 = math.exp %98 : vector<8x128xf32>
    %100 = arith.mulf %93, %99 : vector<8x128xf32>
    %101 = arith.addf %97, %100 : vector<8x128xf32>
    %c64_i32 = arith.constant 64 : i32
    %102 = vector.broadcast %c64_i32 : i32 to vector<8x128xi32>
    %103 = arith.cmpi sge, %2, %102 : vector<8x128xi32>
    %c64_i32_26 = arith.constant 64 : i32
    %104 = tpu.dynamic_rotate %94 by %c64_i32_26 dim 1 : vector<8x128xf32>, i32 -> vector<8x128xf32>
    %cst_27 = arith.constant -1.000000e+30 : f32
    %105 = vector.broadcast %cst_27 : f32 to vector<8x128xf32>
    %106 = arith.select %103, %104, %105 : vector<8x128xi1>, vector<8x128xf32>
    %c64_i32_28 = arith.constant 64 : i32
    %107 = tpu.dynamic_rotate %101 by %c64_i32_28 dim 1 : vector<8x128xf32>, i32 -> vector<8x128xf32>
    %cst_29 = arith.constant 0.000000e+00 : f32
    %108 = vector.broadcast %cst_29 : f32 to vector<8x128xf32>
    %109 = arith.select %103, %107, %108 : vector<8x128xi1>, vector<8x128xf32>
    %110 = arith.maximumf %94, %106 : vector<8x128xf32>
    %111 = arith.subf %94, %110 : vector<8x128xf32>
    %112 = math.exp %111 : vector<8x128xf32>
    %113 = arith.mulf %101, %112 : vector<8x128xf32>
    %114 = arith.subf %106, %110 : vector<8x128xf32>
    %115 = math.exp %114 : vector<8x128xf32>
    %116 = arith.mulf %109, %115 : vector<8x128xf32>
    %117 = arith.addf %113, %116 : vector<8x128xf32>
    %118 = math.log %117 : vector<8x128xf32>
    %119 = arith.addf %110, %118 : vector<8x128xf32>
    %120 = vector.extract_strided_slice %119 {offsets = [0, 0], sizes = [1, 128], strides = [1, 1]} : vector<8x128xf32> to vector<1x128xf32>
    %cst_30 = arith.constant 0.000000e+00 : f32
    %121 = vector.broadcast %cst_30 : f32 to vector<1x128xf32>
    %122 = arith.cmpf ogt, %1, %121 : vector<1x128xf32>
    %123 = arith.subf %0, %120 : vector<1x128xf32>
    %cst_31 = arith.constant 0.000000e+00 : f32
    %124 = vector.broadcast %cst_31 : f32 to vector<1x128xf32>
    %125 = arith.select %122, %123, %124 : vector<1x128xi1>, vector<1x128xf32>
    %126 = arith.mulf %125, %1 : vector<1x128xf32>
    %127 = vector.shape_cast %126 : vector<1x128xf32> to vector<1x1x128xf32>
    %cst_32 = arith.constant dense<0.000000e+00> : vector<1xf32>
    %128 = vector.multi_reduction <add>, %127, %cst_32 [1, 2] : vector<1x1x128xf32> to vector<1xf32>
    %129 = vector.shape_cast %128 : vector<1xf32> to vector<1x1x1xf32>
    %130 = vector.extract %129[0, 0, 0] : f32 from vector<1x1x1xf32>
    %131 = vector.shape_cast %1 : vector<1x128xf32> to vector<1x1x128xf32>
    %cst_33 = arith.constant dense<0.000000e+00> : vector<1xf32>
    %132 = vector.multi_reduction <add>, %131, %cst_33 [1, 2] : vector<1x1x128xf32> to vector<1xf32>
    %133 = vector.shape_cast %132 : vector<1xf32> to vector<1x1x1xf32>
    %134 = vector.extract %133[0, 0, 0] : f32 from vector<1x1x1xf32>
    %cst_34 = arith.constant 9.99999993E-9 : f32
    %135 = arith.addf %134, %cst_34 : f32
    %cst_35 = arith.constant 0.000000e+00 : f32
    %136 = arith.subf %cst_35, %130 : f32
    %137 = arith.divf %136, %135 : f32
    %c0_36 = arith.constant 0 : index
    %c0_37 = arith.constant 0 : index
    %138 = memref.load %arg1[%c0_36, %c0_37] : memref<1x1xf32, #tpu.memory_space<smem>>
    memref.store %137, %arg1[%c0_36, %c0_37] : memref<1x1xf32, #tpu.memory_space<smem>>
    return
  }
}

</mosaic_0001>

<llo_original>
// kernel: neg.1
$region0: #{neg.1}
  #allocation0 [shape = 's32[1]{0}', space=sflag, size = 0x4, scoped, tag = 'scoped memory for neg.1']
  %s0 = inlined_call_operand.vmem [shape: f32[8], index: 0, kind: input, shape index: {}]
  %s1 = inlined_call_operand.vmem [shape: f32[8], index: 1, kind: output, shape index: {}]
  %v2 = vld [vmem:[%s0] sm:$0x1]
  %3 = xla_tuple %v2
  %4 = xla_tuple %3
  %v5 = vxor.u32 %v2, 2147483648
  %6 = xla_tuple %v5
  %7 = vst [vmem:[%s1] sm:$0x1] %v5

// kernel: coxph_loss.1
$region0: #{coxph_loss.1}
  #allocation0 [shape = 'u32[]', space=smem, size = 0x4, offset = 0x4, fixed_abs, tag = 'smem constant byte address 0x4 - core index']
  #allocation1 [shape = 'u32[144,128]{1,0:T(1,128)}', space=vmem, size = 0x12000, scoped, tag = 'internal scratch']
  %s0 = inlined_call_operand.vmem [shape: f32[2,128], index: 0, kind: input, shape index: {}]
  %s1 = inlined_call_operand.hbm [shape: f32[1,1], index: 1, kind: output, shape index: {}]
  %s2 = sld [smem:[#allocation0]]
  $region14: #{coxph_loss.1} parent=0
    _
  %s4 = ssub.s32 1, %s2
  %s5 = scalar_select 0, %s4, %s2
  $region1: #{coxph_loss.1} parent=0
    #allocation2 [shape = 'u8[512]{0}', space=smem, size = 0x200, scoped, tag = 'output window, operand 0, single buffered']
    #allocation3 [shape = 's32[1]{0}', space=sflag, size = 0x4, scoped, tag = 'scoped memory for coxph_loss.1']
    %6 = vsyncpa [#allocation3], 0
    // Predicated region
    $region2: #{coxph_loss.1} parent=1 // pred_check
      _
    $region3: #{coxph_loss.1} parent=1 // pred_check_branch
      %8 = sbr.rel (0) target = $region5
    $region4: #{coxph_loss.1} parent=1 // pred_region
      _
    $region5: #{coxph_loss.1} parent=1 // pred_fallthru
      _
    %v9 = vld [vmem:[%s0] sm:$0x1]
    %v10 = vld [vmem:[%s0 + $0x1] sm:$0x1]
    %v11 = vlaneseq
    %v12 = vand.u32 %v11, 127
    %v13 = vlaneseq
    %v14 = vshrl.u32 %v13, 7
    %v15 = vsub.s32 0, %v14
    %v16 = vrot.slane %v9, %v15
    %vm17 = vcmp.ge.s32.totalorder %v12, 1
    %18 = vrot.lane.b32.xlu0 %v16, 1
    %v19 = vpop.permute.xlu0 %18
    %v20 = vsel %vm17, %v19, -1e+30
    %21 = vrot.lane.b32.xlu0 1.0, 1
    %v22 = vpop.permute.xlu0 %21
    %v23 = vsel %vm17, %v22, 0.0
    %v24 = vmax.f32 %v16, %v20
    %v25 = vsub.f32 %v16, %v24
    %v26 = vmul.f32 %v25, 1.442695
    %v27 = vpow.pop %v26
    %v28 = vsub.f32 %v20, %v24
    %v29 = vmul.f32 %v28, 1.442695
    %v30 = vpow.pop %v29
    %v31 = vmul.f32 %v23, %v30
    %v32 = vadd.f32 %v27, %v31
    %vm33 = vcmp.ge.s32.totalorder %v12, 2
    %34 = vrot.lane.b32.xlu0 %v24, 2
    %v35 = vpop.permute.xlu0 %34
    %v36 = vsel %vm33, %v35, -1e+30
    %37 = vrot.lane.b32.xlu0 %v32, 2
    %v38 = vpop.permute.xlu0 %37
    %v39 = vsel %vm33, %v38, 0.0
    %v40 = vmax.f32 %v24, %v36
    %v41 = vsub.f32 %v24, %v40
    %v42 = vmul.f32 %v41, 1.442695
    %v43 = vpow.pop %v42
    %v44 = vmul.f32 %v32, %v43
    %v45 = vsub.f32 %v36, %v40
    %v46 = vmul.f32 %v45, 1.442695
    %v47 = vpow.pop %v46
    %v48 = vmul.f32 %v39, %v47
    %v49 = vadd.f32 %v44, %v48
    %vm50 = vcmp.ge.s32.totalorder %v12, 4
    %51 = vrot.lane.b32.xlu0 %v40, 4
    %v52 = vpop.permute.xlu0 %51
    %v53 = vsel %vm50, %v52, -1e+30
    %54 = vrot.lane.b32.xlu0 %v49, 4
    %v55 = vpop.permute.xlu0 %54
    %v56 = vsel %vm50, %v55, 0.0
    %v57 = vmax.f32 %v40, %v53
    %v58 = vsub.f32 %v40, %v57
    %v59 = vmul.f32 %v58, 1.442695
    %v60 = vpow.pop %v59
    %v61 = vmul.f32 %v49, %v60
    %v62 = vsub.f32 %v53, %v57
    %v63 = vmul.f32 %v62, 1.442695
    %v64 = vpow.pop %v63
    %v65 = vmul.f32 %v56, %v64
    %v66 = vadd.f32 %v61, %v65
    %vm67 = vcmp.ge.s32.totalorder %v12, 8
    %68 = vrot.lane.b32.xlu0 %v57, 8
    %v69 = vpop.permute.xlu0 %68
    %v70 = vsel %vm67, %v69, -1e+30
    %71 = vrot.lane.b32.xlu0 %v66, 8
    %v72 = vpop.permute.xlu0 %71
    %v73 = vsel %vm67, %v72, 0.0
    %v74 = vmax.f32 %v57, %v70
    %v75 = vsub.f32 %v57, %v74
    %v76 = vmul.f32 %v75, 1.442695
    %v77 = vpow.pop %v76
    %v78 = vmul.f32 %v66, %v77
    %v79 = vsub.f32 %v70, %v74
    %v80 = vmul.f32 %v79, 1.442695
    %v81 = vpow.pop %v80
    %v82 = vmul.f32 %v73, %v81
    %v83 = vadd.f32 %v78, %v82
    %vm84 = vcmp.ge.s32.totalorder %v12, 16
    %85 = vrot.lane.b32.xlu0 %v74, 16
    %v86 = vpop.permute.xlu0 %85
    %v87 = vsel %vm84, %v86, -1e+30
    %88 = vrot.lane.b32.xlu0 %v83, 16
    %v89 = vpop.permute.xlu0 %88
    %v90 = vsel %vm84, %v89, 0.0
    %v91 = vmax.f32 %v74, %v87
    %v92 = vsub.f32 %v74, %v91
    %v93 = vmul.f32 %v92, 1.442695
    %v94 = vpow.pop %v93
    %v95 = vmul.f32 %v83, %v94
    %v96 = vsub.f32 %v87, %v91
    %v97 = vmul.f32 %v96, 1.442695
    %v98 = vpow.pop %v97
    %v99 = vmul.f32 %v90, %v98
    %v100 = vadd.f32 %v95, %v99
    %vm101 = vcmp.ge.s32.totalorder %v12, 32
    %102 = vrot.lane.b32.xlu0 %v91, 32
    %v103 = vpop.permute.xlu0 %102
    %v104 = vsel %vm101, %v103, -1e+30
    %105 = vrot.lane.b32.xlu0 %v100, 32
    %v106 = vpop.permute.xlu0 %105
    %v107 = vsel %vm101, %v106, 0.0
    %v108 = vmax.f32 %v91, %v104
    %v109 = vsub.f32 %v91, %v108
    %v110 = vmul.f32 %v109, 1.442695
    %v111 = vpow.pop %v110
    %v112 = vmul.f32 %v100, %v111
    %v113 = vsub.f32 %v104, %v108
    %v114 = vmul.f32 %v113, 1.442695
    %v115 = vpow.pop %v114
    %v116 = vmul.f32 %v107, %v115
    %v117 = vadd.f32 %v112, %v116
    %vm118 = vcmp.ge.s32.totalorder %v12, 64
    %119 = vrot.lane.b32.xlu0 %v108, 64
    %v120 = vpop.permute.xlu0 %119
    %v121 = vsel %vm118, %v120, -1e+30
    %122 = vrot.lane.b32.xlu0 %v117, 64
    %v123 = vpop.permute.xlu0 %122
    %v124 = vsel %vm118, %v123, 0.0
    %v125 = vmax.f32 %v108, %v121
    %v126 = vsub.f32 %v108, %v125
    %v127 = vmul.f32 %v126, 1.442695
    %v128 = vpow.pop %v127
    %v129 = vmul.f32 %v117, %v128
    %v130 = vsub.f32 %v121, %v125
    %v131 = vmul.f32 %v130, 1.442695
    %v132 = vpow.pop %v131
    %v133 = vmul.f32 %v124, %v132
    %v134 = vadd.f32 %v129, %v133
    %v135 = vlog2.pop %v134
    %v136 = vmul.f32 %v135, 0.6931472
    %v137 = vadd.f32 %v125, %v136
    %vm138 = vcmp.gt.f32.partialorder %v10, 0.0
    %v139 = vsub.f32 %v9, %v137
    %v140 = vsel %vm138, %v139, 0.0
    %v141 = vmul.f32 %v140, %v10
    %vm142 = vcmask 1040384
    %v143 = vsel %vm142, %v141, 0.0
    %144 = vadd.xlane.f32.xlu0 %v143
    %v145 = vpop.xlane.xlu0 %144
    %v146 = vrot.slane %v145, 4
    %v147 = vadd.f32 %v145, %v146
    %v148 = vrot.slane %v147, 2
    %v149 = vadd.f32 %v147, %v148
    %v150 = vrot.slane %v149, 1
    %v151 = vadd.f32 %v149, %v150
    %s152 = vtos %v151
    %v153 = vsel %vm142, %v10, 0.0
    %154 = vadd.xlane.f32.xlu0 %v153
    %v155 = vpop.xlane.xlu0 %154
    %v156 = vrot.slane %v155, 4
    %v157 = vadd.f32 %v155, %v156
    %v158 = vrot.slane %v157, 2
    %v159 = vadd.f32 %v157, %v158
    %v160 = vrot.slane %v159, 1
    %v161 = vadd.f32 %v159, %v160
    %s162 = vtos %v161
    %s163 = sadd.f32 %s162, 1e-08
    %s164 = ssub.f32 0.0, %s152
    %v165 = vstv %s163
    %v166 = vrcp.pop %v165
    %s167 = vtos %v166
    %s168 = smul.f32 %s164, %s167
    %s169 = scalar_lea.smem [#allocation2], 0
    %170 = sst [smem:[%s169]] %s168
    // Predicated region
    $region6: #{coxph_loss.1} parent=1 // pred_check
      _
    $region7: #{coxph_loss.1} parent=1 // pred_check_branch
      %172 = sbr.rel (0) target = $region9
    $region8: #{coxph_loss.1} parent=1 // pred_region
      %s174 = ssub.s32 16, 16
      %175 = vsyncadd [#allocation3], %s174
      %178 = dma.smem_to_hbm [#allocation2], 16, %s1, [#allocation3]
    $region9: #{coxph_loss.1} parent=1 // pred_fallthru
      _
    // Predicated region
    $region10: #{coxph_loss.1} parent=1 // pred_check
      _
    $region11: #{coxph_loss.1} parent=1 // pred_check_branch
      %180 = sbr.rel (0) target = $region13
    $region12: #{coxph_loss.1} parent=1 // pred_region
      %181 = dma.done [#allocation3], 16
    $region13: #{coxph_loss.1} parent=1 // pred_fallthru
      _
    %182 = sfence
    %183 = vsyncpa [#allocation3], 1

</llo_original>
